<compile_context>
chip_gen: v7x
topology: tpu7x:2x2x1
jax: 0.10.0
libtpu: 0.0.40
codegen_flags: <defaults>
</compile_context>

<pallas_src>
import functools

import jax
import jax.numpy as jnp
from jax.experimental import pallas as pl
from jax.experimental.pallas import tpu as pltpu


def self_attention_kernel(x_ref, wqkv_ref, wo_ref, bo_ref, o_ref, *,
                          bt, seq, nheads, att_dim):
    H, D = nheads, att_dim
    HD = H * D
    S = seq

    x = x_ref[...]                                          # [bt*S, E] bf16

    # ---- fused QKV projection: one lane-dense 2-D matmul -------------------
    # [bt*S, E] @ [E, 3*H*D] -> [bt*S, 3*H*D], f32 accumulation.
    qkv = jnp.dot(x, wqkv_ref[...], preferred_element_type=jnp.float32)
    qkv = qkv.reshape(bt, S, 3 * HD)                        # split leading dim only

    # ---- attention per head (score / PV einsums batched over the batch dim) -
    o_heads = []
    for h in range(H):                                      # H is small & static
        q = qkv[:, :, h * D:(h + 1) * D]                    # [bt, S, D] (scale pre-folded)
        k = qkv[:, :, HD + h * D:HD + (h + 1) * D]          # [bt, S, D]
        v = qkv[:, :, 2 * HD + h * D:2 * HD + (h + 1) * D]  # [bt, S, D]

        s = jnp.einsum('bqd,bkd->bqk',
                       q.astype(jnp.bfloat16), k.astype(jnp.bfloat16),
                       preferred_element_type=jnp.float32)  # [bt, S, S] f32
        s = s - jnp.max(s, axis=-1, keepdims=True)          # stable softmax (f32)
        p = jnp.exp(s)
        l = jnp.sum(p, axis=-1, keepdims=True)              # [bt, S, 1]
        # dropout(p) == identity at inference
        oh = jnp.einsum('bqk,bkd->bqd',
                        p.astype(jnp.bfloat16), v.astype(jnp.bfloat16),
                        preferred_element_type=jnp.float32)  # unnormalized [bt, S, D]
        # normalize AFTER the PV matmul: S*D elements, reciprocal on the EUP slot
        oh = oh * pl.reciprocal(l, approx=True)
        o_heads.append(oh)

    o = jnp.concatenate(o_heads, axis=-1)                   # [bt, S, H*D], head-major columns
    o2 = o.reshape(bt * S, HD).astype(jnp.bfloat16)         # merge leading dims only

    # ---- output projection: one 2-D matmul, contraction depth H*D ----------
    out = jnp.dot(o2, wo_ref[...], preferred_element_type=jnp.float32) + bo_ref[...]
    # dropout(out) == identity at inference
    o_ref[...] = out.astype(o_ref.dtype)                    # [bt*S, E]


def self_attention_pallas(x, wq, wk, wv, wo, bo, *, nheads, att_dim, batch_tile=None):
    B, S, E = x.shape
    H, D = nheads, att_dim
    HD = H * D
    assert wq.shape == (E, HD) and wk.shape == (E, HD) and wv.shape == (E, HD)
    assert wo.shape == (HD, E) and bo.shape == (1, E)

    bt = B if batch_tile is None else batch_tile
    assert B % bt == 0
    grid = (B // bt,)

    scale = float(HD) ** (-0.5)                             # hidden_dim**-0.5, as in torch
    # Fuse Q/K/V into one [E, 3*H*D] weight; fold the softmax scale into the
    # q-columns (one-time wrapper-side transform, constant-foldable).
    wqkv = jnp.concatenate([wq * scale, wk, wv], axis=-1)

    # bf16 matmul operands (halves DMA bytes, 2x MXU on v6e/v7x); f32 accumulation
    # and f32 softmax math stay inside the kernel.
    x2d = x.reshape(B * S, E).astype(jnp.bfloat16)
    wqkv = wqkv.astype(jnp.bfloat16)
    wo_b = wo.astype(jnp.bfloat16)
    bo_f = bo.astype(jnp.float32)

    kernel = functools.partial(self_attention_kernel, bt=bt, seq=S, nheads=H, att_dim=D)

    out2d = pl.pallas_call(
        kernel,
        out_shape=jax.ShapeDtypeStruct((B * S, E), x.dtype),
        grid_spec=pltpu.PrefetchScalarGridSpec(
            num_scalar_prefetch=0,
            grid=grid,
            in_specs=[
                pl.BlockSpec((bt * S, E), lambda i: (i, 0)),      # x, one batch-tile
                pl.BlockSpec((E, 3 * HD), lambda i: (0, 0)),      # fused QKV weight (constant)
                pl.BlockSpec((HD, E), lambda i: (0, 0)),          # Wo (constant)
                pl.BlockSpec((1, E), lambda i: (0, 0)),           # output bias
            ],
            out_specs=pl.BlockSpec((bt * S, E), lambda i: (i, 0)),
        ),
        compiler_params=pltpu.CompilerParams(
            # 1 step at the toy shape; batch-tiles shard across v7x TCs when grid > 1.
            dimension_semantics=("parallel",),
            vmem_limit_bytes=32 * 1024 * 1024),
    )(x2d, wqkv, wo_b, bo_f)

    return out2d.reshape(B, S, E)


# ------------------------- plain-JAX reference (for checking) ----------------
def self_attention_reference(x, wq, wk, wv, wo, bo, *, nheads, att_dim):
    B, S, E = x.shape
    H, D = nheads, att_dim
    scale = float(H * D) ** (-0.5)
    q = (x @ wq).reshape(B, S, H, D).transpose(0, 2, 1, 3)
    k = (x @ wk).reshape(B, S, H, D).transpose(0, 2, 1, 3)
    v = (x @ wv).reshape(B, S, H, D).transpose(0, 2, 1, 3)
    s = jnp.einsum('bhqd,bhkd->bhqk', q, k) * scale
    a = jax.nn.softmax(s, axis=-1)
    o = jnp.einsum('bhqk,bhkd->bhqd', a, v)
    o = o.transpose(0, 2, 1, 3).reshape(B, S, H * D)
    return o @ wo + bo[0]


if __name__ == "__main__":
    # SelfAttention(indim=32, att_dim=8, nheads=2, dropout=0.0); x: [B=2, S=8, indim=32]
    indim, att_dim, nheads = 32, 8, 2
    B, S = 2, 8
    HD = nheads * att_dim

    key = jax.random.PRNGKey(0)
    kx, k0, k1, k2, k3, k4 = jax.random.split(key, 6)
    sw = 0.05
    x = jax.random.normal(kx, (B, S, indim), jnp.float32)
    # weights stored pre-transposed as [in, out] so the kernel computes x @ W
    wq = sw * jax.random.normal(k0, (indim, HD), jnp.float32)
    wk = sw * jax.random.normal(k1, (indim, HD), jnp.float32)
    wv = sw * jax.random.normal(k2, (indim, HD), jnp.float32)
    wo = sw * jax.random.normal(k3, (HD, indim), jnp.float32)
    bo = sw * jax.random.normal(k4, (1, indim), jnp.float32)

    out = self_attention_pallas(x, wq, wk, wv, wo, bo, nheads=nheads, att_dim=att_dim)
    out = jax.block_until_ready(out)

    ref = self_attention_reference(x, wq, wk, wv, wo, bo, nheads=nheads, att_dim=att_dim)
    assert out.shape == (B, S, indim)
    # tolerance covers bf16 matmul operands + the approximate (EUP) reciprocal
    assert jnp.allclose(out, ref, atol=5e-3, rtol=5e-3), "mismatch vs reference"

    print("KERNEL_OK")
</pallas_src>

<mosaic_0001>
module attributes {stable_mosaic.version = 11 : i64} {
  func.func @self_attention_kernel(%arg0: i32, %arg1: memref<16x32xbf16, #tpu.memory_space<vmem>>, %arg2: memref<32x48xbf16, #tpu.memory_space<vmem>>, %arg3: memref<16x32xbf16, #tpu.memory_space<vmem>>, %arg4: memref<1x32xf32, #tpu.memory_space<vmem>>, %arg5: memref<16x32xf32, #tpu.memory_space<vmem>>) attributes {dimension_semantics = [#tpu.dimension_semantics<parallel>], iteration_bounds = array<i64: 1>, scalar_prefetch = 0 : i64, scratch_operands = 0 : i64, tpu.core_type = #tpu.core_type<tc>, window_params = [{transform_indices = @transform_0, window_bounds = array<i64: 16, 32>}, {pipeline_mode = #tpu.pipeline_mode<synchronous>, transform_indices = @transform_1, window_bounds = array<i64: 32, 48>}, {pipeline_mode = #tpu.pipeline_mode<synchronous>, transform_indices = @transform_2, window_bounds = array<i64: 16, 32>}, {pipeline_mode = #tpu.pipeline_mode<synchronous>, transform_indices = @transform_3, window_bounds = array<i64: 1, 32>}, {transform_indices = @transform_4, window_bounds = array<i64: 16, 32>}]} {
    %c0 = arith.constant 0 : index
    %c0_0 = arith.constant 0 : index
    %0 = vector.load %arg1[%c0, %c0_0] : memref<16x32xbf16, #tpu.memory_space<vmem>>, vector<16x32xbf16>
    %c0_1 = arith.constant 0 : index
    %c0_2 = arith.constant 0 : index
    %1 = vector.load %arg2[%c0_1, %c0_2] : memref<32x48xbf16, #tpu.memory_space<vmem>>, vector<32x48xbf16>
    %cst = arith.constant dense<0.000000e+00> : vector<16x48xf32>
    %2 = tpu.matmul %0, %1, %cst {dimension_numbers = #tpu.dot_dimension_numbers<[1], [0], [0], [1], [0, 0, 1, 1], [], []>} : vector<16x32xbf16>, vector<32x48xbf16>, vector<16x48xf32> -> vector<16x48xf32>
    %3 = vector.shape_cast %2 : vector<16x48xf32> to vector<2x8x48xf32>
    %4 = vector.extract_strided_slice %3 {offsets = [0, 0, 0], sizes = [2, 8, 8], strides = [1, 1, 1]} : vector<2x8x48xf32> to vector<2x8x8xf32>
    %5 = vector.extract_strided_slice %3 {offsets = [0, 0, 16], sizes = [2, 8, 8], strides = [1, 1, 1]} : vector<2x8x48xf32> to vector<2x8x8xf32>
    %6 = vector.extract_strided_slice %3 {offsets = [0, 0, 32], sizes = [2, 8, 8], strides = [1, 1, 1]} : vector<2x8x48xf32> to vector<2x8x8xf32>
    %7 = arith.truncf %4 : vector<2x8x8xf32> to vector<2x8x8xbf16>
    %8 = arith.truncf %5 : vector<2x8x8xf32> to vector<2x8x8xbf16>
    "tpu.trace_start"() <{level = 10 : i32, message = "bqd,bkd->bqk"}> : () -> ()
    %cst_3 = arith.constant dense<0.000000e+00> : vector<2x8x8xf32>
    %9 = tpu.matmul %7, %8, %cst_3 {dimension_numbers = #tpu.dot_dimension_numbers<[2], [2], [1], [1], [0, 0, 0, 1, 1, 1], [0], [0]>} : vector<2x8x8xbf16>, vector<2x8x8xbf16>, vector<2x8x8xf32> -> vector<2x8x8xf32>
    "tpu.trace_stop"() : () -> ()
    %cst_4 = arith.constant dense<0xFF800000> : vector<2x8xf32>
    %10 = vector.multi_reduction <maximumf>, %9, %cst_4 [2] : vector<2x8x8xf32> to vector<2x8xf32>
    %11 = vector.shape_cast %10 : vector<2x8xf32> to vector<2x8x1xf32>
    %12 = vector.broadcast %11 : vector<2x8x1xf32> to vector<2x8x8xf32>
    %13 = arith.subf %9, %12 : vector<2x8x8xf32>
    %14 = math.exp %13 : vector<2x8x8xf32>
    %cst_5 = arith.constant dense<0.000000e+00> : vector<2x8xf32>
    %15 = vector.multi_reduction <add>, %14, %cst_5 [2] : vector<2x8x8xf32> to vector<2x8xf32>
    %16 = vector.shape_cast %15 : vector<2x8xf32> to vector<2x8x1xf32>
    %17 = arith.truncf %14 : vector<2x8x8xf32> to vector<2x8x8xbf16>
    %18 = arith.truncf %6 : vector<2x8x8xf32> to vector<2x8x8xbf16>
    "tpu.trace_start"() <{level = 10 : i32, message = "bqk,bkd->bqd"}> : () -> ()
    %cst_6 = arith.constant dense<0.000000e+00> : vector<2x8x8xf32>
    %19 = tpu.matmul %17, %18, %cst_6 {dimension_numbers = #tpu.dot_dimension_numbers<[2], [1], [1], [2], [0, 0, 0, 1, 1, 2], [0], [0]>} : vector<2x8x8xbf16>, vector<2x8x8xbf16>, vector<2x8x8xf32> -> vector<2x8x8xf32>
    "tpu.trace_stop"() : () -> ()
    %20 = tpu.reciprocal %16 {approx = true} : vector<2x8x1xf32> -> vector<2x8x1xf32>
    %21 = vector.broadcast %20 : vector<2x8x1xf32> to vector<2x8x8xf32>
    %22 = arith.mulf %19, %21 : vector<2x8x8xf32>
    %23 = vector.extract_strided_slice %3 {offsets = [0, 0, 8], sizes = [2, 8, 8], strides = [1, 1, 1]} : vector<2x8x48xf32> to vector<2x8x8xf32>
    %24 = vector.extract_strided_slice %3 {offsets = [0, 0, 24], sizes = [2, 8, 8], strides = [1, 1, 1]} : vector<2x8x48xf32> to vector<2x8x8xf32>
    %25 = vector.extract_strided_slice %3 {offsets = [0, 0, 40], sizes = [2, 8, 8], strides = [1, 1, 1]} : vector<2x8x48xf32> to vector<2x8x8xf32>
    %26 = arith.truncf %23 : vector<2x8x8xf32> to vector<2x8x8xbf16>
    %27 = arith.truncf %24 : vector<2x8x8xf32> to vector<2x8x8xbf16>
    "tpu.trace_start"() <{level = 10 : i32, message = "bqd,bkd->bqk"}> : () -> ()
    %cst_7 = arith.constant dense<0.000000e+00> : vector<2x8x8xf32>
    %28 = tpu.matmul %26, %27, %cst_7 {dimension_numbers = #tpu.dot_dimension_numbers<[2], [2], [1], [1], [0, 0, 0, 1, 1, 1], [0], [0]>} : vector<2x8x8xbf16>, vector<2x8x8xbf16>, vector<2x8x8xf32> -> vector<2x8x8xf32>
    "tpu.trace_stop"() : () -> ()
    %cst_8 = arith.constant dense<0xFF800000> : vector<2x8xf32>
    %29 = vector.multi_reduction <maximumf>, %28, %cst_8 [2] : vector<2x8x8xf32> to vector<2x8xf32>
    %30 = vector.shape_cast %29 : vector<2x8xf32> to vector<2x8x1xf32>
    %31 = vector.broadcast %30 : vector<2x8x1xf32> to vector<2x8x8xf32>
    %32 = arith.subf %28, %31 : vector<2x8x8xf32>
    %33 = math.exp %32 : vector<2x8x8xf32>
    %cst_9 = arith.constant dense<0.000000e+00> : vector<2x8xf32>
    %34 = vector.multi_reduction <add>, %33, %cst_9 [2] : vector<2x8x8xf32> to vector<2x8xf32>
    %35 = vector.shape_cast %34 : vector<2x8xf32> to vector<2x8x1xf32>
    %36 = arith.truncf %33 : vector<2x8x8xf32> to vector<2x8x8xbf16>
    %37 = arith.truncf %25 : vector<2x8x8xf32> to vector<2x8x8xbf16>
    "tpu.trace_start"() <{level = 10 : i32, message = "bqk,bkd->bqd"}> : () -> ()
    %cst_10 = arith.constant dense<0.000000e+00> : vector<2x8x8xf32>
    %38 = tpu.matmul %36, %37, %cst_10 {dimension_numbers = #tpu.dot_dimension_numbers<[2], [1], [1], [2], [0, 0, 0, 1, 1, 2], [0], [0]>} : vector<2x8x8xbf16>, vector<2x8x8xbf16>, vector<2x8x8xf32> -> vector<2x8x8xf32>
    "tpu.trace_stop"() : () -> ()
    %39 = tpu.reciprocal %35 {approx = true} : vector<2x8x1xf32> -> vector<2x8x1xf32>
    %40 = vector.broadcast %39 : vector<2x8x1xf32> to vector<2x8x8xf32>
    %41 = arith.mulf %38, %40 : vector<2x8x8xf32>
    %42 = tpu.concatenate %22, %41 in 2 : vector<2x8x8xf32>, vector<2x8x8xf32> -> vector<2x8x16xf32>
    %43 = vector.shape_cast %42 : vector<2x8x16xf32> to vector<16x16xf32>
    %44 = arith.truncf %43 : vector<16x16xf32> to vector<16x16xbf16>
    %c0_11 = arith.constant 0 : index
    %c0_12 = arith.constant 0 : index
    %45 = vector.load %arg3[%c0_11, %c0_12] : memref<16x32xbf16, #tpu.memory_space<vmem>>, vector<16x32xbf16>
    %cst_13 = arith.constant dense<0.000000e+00> : vector<16x32xf32>
    %46 = tpu.matmul %44, %45, %cst_13 {dimension_numbers = #tpu.dot_dimension_numbers<[1], [0], [0], [1], [0, 0, 1, 1], [], []>} : vector<16x16xbf16>, vector<16x32xbf16>, vector<16x32xf32> -> vector<16x32xf32>
    %c0_14 = arith.constant 0 : index
    %c0_15 = arith.constant 0 : index
    %47 = vector.load %arg4[%c0_14, %c0_15] : memref<1x32xf32, #tpu.memory_space<vmem>>, vector<1x32xf32>
    %48 = vector.broadcast %47 : vector<1x32xf32> to vector<16x32xf32>
    %49 = arith.addf %46, %48 : vector<16x32xf32>
    %c0_16 = arith.constant 0 : index
    %c0_17 = arith.constant 0 : index
    %50 = vector.load %arg5[%c0_16, %c0_17] : memref<16x32xf32, #tpu.memory_space<vmem>>, vector<16x32xf32>
    tpu.vector_store %arg5[%c0_16, %c0_17], %49 {strides = array<i32>} : memref<16x32xf32, #tpu.memory_space<vmem>>, vector<16x32xf32>,
    return
  }
  func.func @transform_0(%arg0: i32) -> (i32, i32) {
    %c0_i32 = arith.constant 0 : i32
    %c0_i32_0 = arith.constant 0 : i32
    return %arg0, %c0_i32 : i32, i32
  }
  func.func @transform_1(%arg0: i32) -> (i32, i32) {
    %c0_i32 = arith.constant 0 : i32
    %c0_i32_0 = arith.constant 0 : i32
    %c0_i32_1 = arith.constant 0 : i32
    return %c0_i32, %c0_i32_0 : i32, i32
  }
  func.func @transform_2(%arg0: i32) -> (i32, i32) {
    %c0_i32 = arith.constant 0 : i32
    %c0_i32_0 = arith.constant 0 : i32
    %c0_i32_1 = arith.constant 0 : i32
    return %c0_i32, %c0_i32_0 : i32, i32
  }
  func.func @transform_3(%arg0: i32) -> (i32, i32) {
    %c0_i32 = arith.constant 0 : i32
    %c0_i32_0 = arith.constant 0 : i32
    %c0_i32_1 = arith.constant 0 : i32
    return %c0_i32, %c0_i32_0 : i32, i32
  }
  func.func @transform_4(%arg0: i32) -> (i32, i32) {
    %c0_i32 = arith.constant 0 : i32
    %c0_i32_0 = arith.constant 0 : i32
    return %arg0, %c0_i32 : i32, i32
  }
}

</mosaic_0001>

<llo_original>
// kernel: tpu_custom_call.1
$region0: #{tpu_custom_call.1}
  #allocation0 [shape = 'u32[]', space=smem, size = 0x4, offset = 0x4, fixed_abs, tag = 'smem constant byte address 0x4 - core index']
  #allocation1 [shape = 'u32[144,128]{1,0:T(1,128)}', space=vmem, size = 0x12000, scoped, tag = 'internal scratch']
  %s0 = inlined_call_operand.hbm [shape: bf16[16,32], index: 0, kind: input, shape index: {}]
  %s1 = inlined_call_operand.hbm [shape: bf16[32,48], index: 1, kind: input, shape index: {}]
  %s2 = inlined_call_operand.hbm [shape: bf16[16,32], index: 2, kind: input, shape index: {}]
  %s3 = inlined_call_operand.vmem [shape: f32[1,32], index: 3, kind: input, shape index: {}]
  %s4 = inlined_call_operand.hbm [shape: f32[16,32], index: 4, kind: output, shape index: {}]
  %s5 = sld [smem:[#allocation0]]
  $region38: #{tpu_custom_call.1} parent=0
    _
  %s7 = ssub.s32 1, %s5
  %s8 = scalar_select 0, %s7, %s5
  $region1: #{tpu_custom_call.1} parent=0
    #allocation2 [shape = 'u8[4096]{0}', space=vmem, size = 0x1000, scoped, tag = 'input window, operand 0, single buffered']
    #allocation3 [shape = 's32[1]{0}', space=sflag, size = 0x4, scoped, tag = 'scoped memory for tpu_custom_call.1']
    #allocation4 [shape = 's32[1]{0}', space=sflag, size = 0x4, scoped, tag = 'scoped memory for tpu_custom_call.1']
    #allocation5 [shape = 'u8[8192]{0}', space=vmem, size = 0x2000, scoped, tag = 'input window, operand 1, single buffered']
    #allocation6 [shape = 's32[1]{0}', space=sflag, size = 0x4, scoped, tag = 'scoped memory for tpu_custom_call.1']
    #allocation7 [shape = 'u8[4096]{0}', space=vmem, size = 0x1000, scoped, tag = 'input window, operand 2, single buffered']
    #allocation8 [shape = 'u8[8192]{0}', space=vmem, size = 0x2000, scoped, tag = 'output window, operand 0, single buffered']
    %9 = vsyncpa [#allocation3], 0
    %10 = vsyncpa [#allocation6], 0
    %11 = vsyncpa [#allocation4], 0
    // Predicated region
    $region2: #{tpu_custom_call.1} parent=1 // pred_check
      _
    $region3: #{tpu_custom_call.1} parent=1 // pred_check_branch
      %13 = sbr.rel (0) target = $region5
    $region4: #{tpu_custom_call.1} parent=1 // pred_region
      %s15 = ssub.s32 128, 128
      %16 = vsyncadd [#allocation3], %s15
      %s17 = sshll.u32 [#allocation2], 4
      %s18 = int_to_ptr.vmem [resolvable:$true] %s17
      %23 = dma.hbm_to_vmem [thread:$0]  %s0, 128, %s18, [#allocation3], 64, 64, 4
    $region5: #{tpu_custom_call.1} parent=1 // pred_fallthru
      _
    // Predicated region
    $region6: #{tpu_custom_call.1} parent=1 // pred_check
      _
    $region7: #{tpu_custom_call.1} parent=1 // pred_check_branch
      %25 = sbr.rel (0) target = $region9
    $region8: #{tpu_custom_call.1} parent=1 // pred_region
      %s27 = ssub.s32 256, 256
      %28 = vsyncadd [#allocation6], %s27
      %s29 = sshll.u32 [#allocation5], 4
      %s30 = int_to_ptr.vmem [resolvable:$true] %s29
      %35 = dma.hbm_to_vmem [thread:$0]  %s1, 256, %s30, [#allocation6], 64, 64, 4
    $region9: #{tpu_custom_call.1} parent=1 // pred_fallthru
      _
    // Predicated region
    $region10: #{tpu_custom_call.1} parent=1 // pred_check
      _
    $region11: #{tpu_custom_call.1} parent=1 // pred_check_branch
      %37 = sbr.rel (0) target = $region13
    $region12: #{tpu_custom_call.1} parent=1 // pred_region
      %s39 = ssub.s32 128, 128
      %40 = vsyncadd [#allocation6], %s39
      %s41 = sshll.u32 [#allocation7], 4
      %s42 = int_to_ptr.vmem [resolvable:$true] %s41
      %47 = dma.hbm_to_vmem [thread:$0]  %s2, 128, %s42, [#allocation6], 64, 64, 4
    $region13: #{tpu_custom_call.1} parent=1 // pred_fallthru
      _
    // Predicated region
    $region14: #{tpu_custom_call.1} parent=1 // pred_check
      _
    $region15: #{tpu_custom_call.1} parent=1 // pred_check_branch
      %49 = sbr.rel (0) target = $region17
    $region16: #{tpu_custom_call.1} parent=1 // pred_region
      _
    $region17: #{tpu_custom_call.1} parent=1 // pred_fallthru
      _
    // Predicated region
    $region18: #{tpu_custom_call.1} parent=1 // pred_check
      _
    $region19: #{tpu_custom_call.1} parent=1 // pred_check_branch
      %51 = sbr.rel (0) target = $region21
    $region20: #{tpu_custom_call.1} parent=1 // pred_region
      %52 = dma.done [#allocation3], 128
    $region21: #{tpu_custom_call.1} parent=1 // pred_fallthru
      _
    // Predicated region
    $region22: #{tpu_custom_call.1} parent=1 // pred_check
      _
    $region23: #{tpu_custom_call.1} parent=1 // pred_check_branch
      %54 = sbr.rel (0) target = $region25
    $region24: #{tpu_custom_call.1} parent=1 // pred_region
      %55 = dma.done [#allocation6], 256
    $region25: #{tpu_custom_call.1} parent=1 // pred_fallthru
      _
    // Predicated region
    $region26: #{tpu_custom_call.1} parent=1 // pred_check
      _
    $region27: #{tpu_custom_call.1} parent=1 // pred_check_branch
      %57 = sbr.rel (0) target = $region29
    $region28: #{tpu_custom_call.1} parent=1 // pred_region
      %58 = dma.done [#allocation6], 128
    $region29: #{tpu_custom_call.1} parent=1 // pred_fallthru
      _
    %v60 = vld [vmem:[#allocation2] sm:$0xf]
    %v61 = vld [vmem:[#allocation2 + $0x4] sm:$0xf]
    %v62 = vld [vmem:[#allocation5] sm:$0xf]
    %v63 = vld [vmem:[#allocation5 + $0x4] sm:$0xf]
    %v64 = vld [vmem:[#allocation5 + $0x8] sm:$0xf]
    %v65 = vld [vmem:[#allocation5 + $0xc] sm:$0xf]
    %v68 = vunpack.c.l.b16 %v60
    %v69 = vunpack.c.l.b16 %v61
    %v70 = vpack.c.b16 %v69, %v68
    %v75 = vunpack.c.l.b16 %v62
    %v76 = vunpack.c.l.b16 %v63
    %v77 = vunpack.c.l.b16 %v64
    %v78 = vunpack.c.l.b16 %v65
    %v79 = vpack.c.b16 %v76, %v75
    %v80 = vpack.c.b16 %v78, %v77
    %vm83 = vcmask 261120
    %v85 = vsel %vm83, %v70, 0
    %87 = vmatprep.subr.bf16.mxu0 0
    %88 = vmatpush1.bf16.msra.mxu0 %v79
    %89 = vmatprep.subr.bf16.mxu0 0
    %90 = vmatpush1.bf16.msra.mxu0 %v80
    %91 = vmatprep.subr.bf16.mxu0 0
    %92 = vmatpush1.bf16.msra.mxu0 0
    %93 = vmatprep.subr.bf16.mxu0 0
    %94 = vmatpush1.bf16.msra.mxu0 0
    %95 = vmatprep.subr.bf16.mxu0 0
    %96 = vmatpush1.bf16.msra.mxu0 0
    %97 = vmatprep.subr.bf16.mxu0 0
    %98 = vmatpush1.bf16.msra.mxu0 0
    %99 = vmatprep.subr.bf16.mxu0 0
    %100 = vmatpush1.bf16.msra.mxu0 0
    %101 = vmatprep.subr.bf16.mxu0 0
    %102 = vmatpush1.bf16.msra.mxu0 0
    %103 = vmatprep.subr.bf16.mxu0 0
    %104 = vmatpush1.bf16.msra.mxu0 0
    %105 = vmatprep.subr.bf16.mxu0 0
    %106 = vmatpush1.bf16.msra.mxu0 0
    %107 = vmatprep.subr.bf16.mxu0 0
    %108 = vmatpush1.bf16.msra.mxu0 0
    %109 = vmatprep.subr.bf16.mxu0 0
    %110 = vmatpush1.bf16.msra.mxu0 0
    %111 = vmatprep.subr.bf16.mxu0 0
    %112 = vmatpush1.bf16.msra.mxu0 0
    %113 = vmatprep.subr.bf16.mxu0 0
    %114 = vmatpush1.bf16.msra.mxu0 0
    %115 = vmatprep.subr.bf16.mxu0 0
    %116 = vmatpush1.bf16.msra.mxu0 0
    %117 = vmatprep.subr.bf16.mxu0 0
    %118 = vmatpush1.bf16.msra.mxu0 0
    %119 = vmatprep.mubr.bf16.mxu0 0
    %120 = vmatmul.mubr.bf16.gmra.mrb[0].mxu0 %v85
    %v121 = vpop.f32.mrb[0].mxu0
    %v122 = vadd.f32 0.0, %v121
    %v123 = vpop.f32.mrb[0].mxu0
    %v124 = vpop.f32.mrb[0].mxu0
    %v125 = vadd.f32 0.0, %v124
    %v126 = vpop.f32.mrb[0].mxu0
    %127 = vdwg.mxu0
    %v128 = vpack.c.bf16 %v122, %v122
    %v129 = vpack.c.bf16 %v125, %v125
    %131 = vrot.lane.b32.xlu0 %v128, 112
    %v132 = vpop.permute.xlu0 %131
    %vm133 = vcmask 64512
    %v135 = vsel %vm133, %v128, 0
    %v138 = vsel %vm133, %v132, 0
    %140 = vmatprep.subr.bf16.mxu0 0
    %141 = vmatpush1.bf16.xpose.msra.mxu0 %v138
    %142 = vmatprep.subr.bf16.mxu0 0
    %143 = vmatpush1.bf16.xpose.msra.mxu0 0
    %144 = vmatprep.subr.bf16.mxu0 0
    %145 = vmatpush1.bf16.xpose.msra.mxu0 0
    %146 = vmatprep.subr.bf16.mxu0 0
    %147 = vmatpush1.bf16.xpose.msra.mxu0 0
    %148 = vmatprep.subr.bf16.mxu0 0
    %149 = vmatpush1.bf16.xpose.msra.mxu0 0
    %150 = vmatprep.subr.bf16.mxu0 0
    %151 = vmatpush1.bf16.xpose.msra.mxu0 0
    %152 = vmatprep.subr.bf16.mxu0 0
    %153 = vmatpush1.bf16.xpose.msra.mxu0 0
    %154 = vmatprep.subr.bf16.mxu0 0
    %155 = vmatpush1.bf16.xpose.msra.mxu0 0
    %156 = vmatprep.subr.bf16.mxu0 0
    %157 = vmatpush1.bf16.xpose.msra.mxu0 0
    %158 = vmatprep.subr.bf16.mxu0 0
    %159 = vmatpush1.bf16.xpose.msra.mxu0 0
    %160 = vmatprep.subr.bf16.mxu0 0
    %161 = vmatpush1.bf16.xpose.msra.mxu0 0
    %162 = vmatprep.subr.bf16.mxu0 0
    %163 = vmatpush1.bf16.xpose.msra.mxu0 0
    %164 = vmatprep.subr.bf16.mxu0 0
    %165 = vmatpush1.bf16.xpose.msra.mxu0 0
    %166 = vmatprep.subr.bf16.mxu0 0
    %167 = vmatpush1.bf16.xpose.msra.mxu0 0
    %168 = vmatprep.subr.bf16.mxu0 0
    %169 = vmatpush1.bf16.xpose.msra.mxu0 0
    %170 = vmatprep.subr.bf16.mxu0 0
    %171 = vmatpush1.bf16.xpose.msra.mxu0 0
    %172 = vmatprep.mubr.bf16.mxu0 0
    %173 = vmatmul.mubr.bf16.gmra.mrb[0].mxu0 %v135
    %v174 = vpop.f32.mrb[0].mxu0
    %v175 = vadd.f32 0.0, %v174
    %v176 = vpop.f32.mrb[0].mxu0
    %v177 = vpop.f32.mrb[0].mxu0
    %v178 = vpop.f32.mrb[0].mxu0
    %179 = vdwg.mxu0
    %181 = vrot.lane.b32.xlu0 %v129, 112
    %v182 = vpop.permute.xlu0 %181
    %v184 = vsel %vm133, %v129, 0
    %v187 = vsel %vm133, %v182, 0
    %189 = vmatprep.subr.bf16.mxu0 0
    %190 = vmatpush1.bf16.xpose.msra.mxu0 %v187
    %191 = vmatprep.subr.bf16.mxu0 0
    %192 = vmatpush1.bf16.xpose.msra.mxu0 0
    %193 = vmatprep.subr.bf16.mxu0 0
    %194 = vmatpush1.bf16.xpose.msra.mxu0 0
    %195 = vmatprep.subr.bf16.mxu0 0
    %196 = vmatpush1.bf16.xpose.msra.mxu0 0
    %197 = vmatprep.subr.bf16.mxu0 0
    %198 = vmatpush1.bf16.xpose.msra.mxu0 0
    %199 = vmatprep.subr.bf16.mxu0 0
    %200 = vmatpush1.bf16.xpose.msra.mxu0 0
    %201 = vmatprep.subr.bf16.mxu0 0
    %202 = vmatpush1.bf16.xpose.msra.mxu0 0
    %203 = vmatprep.subr.bf16.mxu0 0
    %204 = vmatpush1.bf16.xpose.msra.mxu0 0
    %205 = vmatprep.subr.bf16.mxu0 0
    %206 = vmatpush1.bf16.xpose.msra.mxu0 0
    %207 = vmatprep.subr.bf16.mxu0 0
    %208 = vmatpush1.bf16.xpose.msra.mxu0 0
    %209 = vmatprep.subr.bf16.mxu0 0
    %210 = vmatpush1.bf16.xpose.msra.mxu0 0
    %211 = vmatprep.subr.bf16.mxu0 0
    %212 = vmatpush1.bf16.xpose.msra.mxu0 0
    %213 = vmatprep.subr.bf16.mxu0 0
    %214 = vmatpush1.bf16.xpose.msra.mxu0 0
    %215 = vmatprep.subr.bf16.mxu0 0
    %216 = vmatpush1.bf16.xpose.msra.mxu0 0
    %217 = vmatprep.subr.bf16.mxu0 0
    %218 = vmatpush1.bf16.xpose.msra.mxu0 0
    %219 = vmatprep.subr.bf16.mxu0 0
    %220 = vmatpush1.bf16.xpose.msra.mxu0 0
    %221 = vmatprep.mubr.bf16.mxu0 0
    %222 = vmatmul.mubr.bf16.gmra.mrb[0].mxu0 %v184
    %v223 = vpop.f32.mrb[0].mxu0
    %v224 = vadd.f32 0.0, %v223
    %v225 = vpop.f32.mrb[0].mxu0
    %v226 = vpop.f32.mrb[0].mxu0
    %v227 = vpop.f32.mrb[0].mxu0
    %228 = vdwg.mxu0
    %v229 = vsel %vm133, %v175, -inf
    %230 = vmax.xlane.f32.xlu0 %v229
    %v231 = vpop.xlane.xlu0 %230
    %v232 = vsel %vm133, %v224, -inf
    %233 = vmax.xlane.f32.xlu0 %v232
    %v234 = vpop.xlane.xlu0 %233
    %v235 = vsub.f32 %v175, %v231
    %v236 = vsub.f32 %v224, %v234
    %v237 = vmul.f32 %v235, 1.442695
    %v238 = vpow.pop %v237
    %v239 = vmul.f32 %v236, 1.442695
    %v240 = vpow.pop %v239
    %v241 = vsel %vm133, %v238, 0.0
    %242 = vadd.xlane.f32.xlu0 %v241
    %v243 = vpop.xlane.xlu0 %242
    %v244 = vsel %vm133, %v240, 0.0
    %245 = vadd.xlane.f32.xlu0 %v244
    %v246 = vpop.xlane.xlu0 %245
    %v247 = vpack.c.bf16 %v238, %v238
    %v248 = vpack.c.bf16 %v240, %v240
    %249 = vrot.lane.b32.xlu0 %v128, 96
    %v250 = vpop.permute.xlu0 %249
    %v252 = vsel %vm133, %v247, 0
    %vm254 = vcmask 1043456
    %v256 = vsel %vm254, %v250, 0
    %258 = vmatprep.subr.bf16.mxu0 0
    %259 = vmatpush1.bf16.msra.mxu0 %v256
    %260 = vmatprep.subr.bf16.mxu0 0
    %261 = vmatpush1.bf16.msra.mxu0 0
    %262 = vmatprep.subr.bf16.mxu0 0
    %263 = vmatpush1.bf16.msra.mxu0 0
    %264 = vmatprep.subr.bf16.mxu0 0
    %265 = vmatpush1.bf16.msra.mxu0 0
    %266 = vmatprep.subr.bf16.mxu0 0
    %267 = vmatpush1.bf16.msra.mxu0 0
    %268 = vmatprep.subr.bf16.mxu0 0
    %269 = vmatpush1.bf16.msra.mxu0 0
    %270 = vmatprep.subr.bf16.mxu0 0
    %271 = vmatpush1.bf16.msra.mxu0 0
    %272 = vmatprep.subr.bf16.mxu0 0
    %273 = vmatpush1.bf16.msra.mxu0 0
    %274 = vmatprep.subr.bf16.mxu0 0
    %275 = vmatpush1.bf16.msra.mxu0 0
    %276 = vmatprep.subr.bf16.mxu0 0
    %277 = vmatpush1.bf16.msra.mxu0 0
    %278 = vmatprep.subr.bf16.mxu0 0
    %279 = vmatpush1.bf16.msra.mxu0 0
    %280 = vmatprep.subr.bf16.mxu0 0
    %281 = vmatpush1.bf16.msra.mxu0 0
    %282 = vmatprep.subr.bf16.mxu0 0
    %283 = vmatpush1.bf16.msra.mxu0 0
    %284 = vmatprep.subr.bf16.mxu0 0
    %285 = vmatpush1.bf16.msra.mxu0 0
    %286 = vmatprep.subr.bf16.mxu0 0
    %287 = vmatpush1.bf16.msra.mxu0 0
    %288 = vmatprep.subr.bf16.mxu0 0
    %289 = vmatpush1.bf16.msra.mxu0 0
    %290 = vmatprep.mubr.bf16.mxu0 0
    %291 = vmatmul.mubr.bf16.gmra.mrb[0].mxu0 %v252
    %v292 = vpop.f32.mrb[0].mxu0
    %v293 = vadd.f32 0.0, %v292
    %v294 = vpop.f32.mrb[0].mxu0
    %v295 = vpop.f32.mrb[0].mxu0
    %v296 = vpop.f32.mrb[0].mxu0
    %297 = vdwg.mxu0
    %298 = vrot.lane.b32.xlu0 %v129, 96
    %v299 = vpop.permute.xlu0 %298
    %v301 = vsel %vm133, %v248, 0
    %v304 = vsel %vm254, %v299, 0
    %306 = vmatprep.subr.bf16.mxu0 0
    %307 = vmatpush1.bf16.msra.mxu0 %v304
    %308 = vmatprep.subr.bf16.mxu0 0
    %309 = vmatpush1.bf16.msra.mxu0 0
    %310 = vmatprep.subr.bf16.mxu0 0
    %311 = vmatpush1.bf16.msra.mxu0 0
    %312 = vmatprep.subr.bf16.mxu0 0
    %313 = vmatpush1.bf16.msra.mxu0 0
    %314 = vmatprep.subr.bf16.mxu0 0
    %315 = vmatpush1.bf16.msra.mxu0 0
    %316 = vmatprep.subr.bf16.mxu0 0
    %317 = vmatpush1.bf16.msra.mxu0 0
    %318 = vmatprep.subr.bf16.mxu0 0
    %319 = vmatpush1.bf16.msra.mxu0 0
    %320 = vmatprep.subr.bf16.mxu0 0
    %321 = vmatpush1.bf16.msra.mxu0 0
    %322 = vmatprep.subr.bf16.mxu0 0
    %323 = vmatpush1.bf16.msra.mxu0 0
    %324 = vmatprep.subr.bf16.mxu0 0
    %325 = vmatpush1.bf16.msra.mxu0 0
    %326 = vmatprep.subr.bf16.mxu0 0
    %327 = vmatpush1.bf16.msra.mxu0 0
    %328 = vmatprep.subr.bf16.mxu0 0
    %329 = vmatpush1.bf16.msra.mxu0 0
    %330 = vmatprep.subr.bf16.mxu0 0
    %331 = vmatpush1.bf16.msra.mxu0 0
    %332 = vmatprep.subr.bf16.mxu0 0
    %333 = vmatpush1.bf16.msra.mxu0 0
    %334 = vmatprep.subr.bf16.mxu0 0
    %335 = vmatpush1.bf16.msra.mxu0 0
    %336 = vmatprep.subr.bf16.mxu0 0
    %337 = vmatpush1.bf16.msra.mxu0 0
    %338 = vmatprep.mubr.bf16.mxu0 0
    %339 = vmatmul.mubr.bf16.gmra.mrb[0].mxu0 %v301
    %v340 = vpop.f32.mrb[0].mxu0
    %v341 = vadd.f32 0.0, %v340
    %v342 = vpop.f32.mrb[0].mxu0
    %v343 = vpop.f32.mrb[0].mxu0
    %v344 = vpop.f32.mrb[0].mxu0
    %345 = vdwg.mxu0
    %v346 = vrcp.pop %v243
    %v347 = vrcp.pop %v246
    %v348 = vmul.f32 %v293, %v346
    %v349 = vmul.f32 %v341, %v347
    %350 = vrot.lane.b32.xlu0 %v128, 120
    %v351 = vpop.permute.xlu0 %350
    %352 = vrot.lane.b32.xlu0 %v128, 104
    %v353 = vpop.permute.xlu0 %352
    %v355 = vsel %vm133, %v351, 0
    %v358 = vsel %vm133, %v353, 0
    %360 = vmatprep.subr.bf16.mxu0 0
    %361 = vmatpush1.bf16.xpose.msra.mxu0 %v358
    %362 = vmatprep.subr.bf16.mxu0 0
    %363 = vmatpush1.bf16.xpose.msra.mxu0 0
    %364 = vmatprep.subr.bf16.mxu0 0
    %365 = vmatpush1.bf16.xpose.msra.mxu0 0
    %366 = vmatprep.subr.bf16.mxu0 0
    %367 = vmatpush1.bf16.xpose.msra.mxu0 0
    %368 = vmatprep.subr.bf16.mxu0 0
    %369 = vmatpush1.bf16.xpose.msra.mxu0 0
    %370 = vmatprep.subr.bf16.mxu0 0
    %371 = vmatpush1.bf16.xpose.msra.mxu0 0
    %372 = vmatprep.subr.bf16.mxu0 0
    %373 = vmatpush1.bf16.xpose.msra.mxu0 0
    %374 = vmatprep.subr.bf16.mxu0 0
    %375 = vmatpush1.bf16.xpose.msra.mxu0 0
    %376 = vmatprep.subr.bf16.mxu0 0
    %377 = vmatpush1.bf16.xpose.msra.mxu0 0
    %378 = vmatprep.subr.bf16.mxu0 0
    %379 = vmatpush1.bf16.xpose.msra.mxu0 0
    %380 = vmatprep.subr.bf16.mxu0 0
    %381 = vmatpush1.bf16.xpose.msra.mxu0 0
    %382 = vmatprep.subr.bf16.mxu0 0
    %383 = vmatpush1.bf16.xpose.msra.mxu0 0
    %384 = vmatprep.subr.bf16.mxu0 0
    %385 = vmatpush1.bf16.xpose.msra.mxu0 0
    %386 = vmatprep.subr.bf16.mxu0 0
    %387 = vmatpush1.bf16.xpose.msra.mxu0 0
    %388 = vmatprep.subr.bf16.mxu0 0
    %389 = vmatpush1.bf16.xpose.msra.mxu0 0
    %390 = vmatprep.subr.bf16.mxu0 0
    %391 = vmatpush1.bf16.xpose.msra.mxu0 0
    %392 = vmatprep.mubr.bf16.mxu0 0
    %393 = vmatmul.mubr.bf16.gmra.mrb[0].mxu0 %v355
    %v394 = vpop.f32.mrb[0].mxu0
    %v395 = vadd.f32 0.0, %v394
    %v396 = vpop.f32.mrb[0].mxu0
    %v397 = vpop.f32.mrb[0].mxu0
    %v398 = vpop.f32.mrb[0].mxu0
    %399 = vdwg.mxu0
    %400 = vrot.lane.b32.xlu0 %v129, 120
    %v401 = vpop.permute.xlu0 %400
    %402 = vrot.lane.b32.xlu0 %v129, 104
    %v403 = vpop.permute.xlu0 %402
    %v405 = vsel %vm133, %v401, 0
    %v408 = vsel %vm133, %v403, 0
    %410 = vmatprep.subr.bf16.mxu0 0
    %411 = vmatpush1.bf16.xpose.msra.mxu0 %v408
    %412 = vmatprep.subr.bf16.mxu0 0
    %413 = vmatpush1.bf16.xpose.msra.mxu0 0
    %414 = vmatprep.subr.bf16.mxu0 0
    %415 = vmatpush1.bf16.xpose.msra.mxu0 0
    %416 = vmatprep.subr.bf16.mxu0 0
    %417 = vmatpush1.bf16.xpose.msra.mxu0 0
    %418 = vmatprep.subr.bf16.mxu0 0
    %419 = vmatpush1.bf16.xpose.msra.mxu0 0
    %420 = vmatprep.subr.bf16.mxu0 0
    %421 = vmatpush1.bf16.xpose.msra.mxu0 0
    %422 = vmatprep.subr.bf16.mxu0 0
    %423 = vmatpush1.bf16.xpose.msra.mxu0 0
    %424 = vmatprep.subr.bf16.mxu0 0
    %425 = vmatpush1.bf16.xpose.msra.mxu0 0
    %426 = vmatprep.subr.bf16.mxu0 0
    %427 = vmatpush1.bf16.xpose.msra.mxu0 0
    %428 = vmatprep.subr.bf16.mxu0 0
    %429 = vmatpush1.bf16.xpose.msra.mxu0 0
    %430 = vmatprep.subr.bf16.mxu0 0
    %431 = vmatpush1.bf16.xpose.msra.mxu0 0
    %432 = vmatprep.subr.bf16.mxu0 0
    %433 = vmatpush1.bf16.xpose.msra.mxu0 0
    %434 = vmatprep.subr.bf16.mxu0 0
    %435 = vmatpush1.bf16.xpose.msra.mxu0 0
    %436 = vmatprep.subr.bf16.mxu0 0
    %437 = vmatpush1.bf16.xpose.msra.mxu0 0
    %438 = vmatprep.subr.bf16.mxu0 0
    %439 = vmatpush1.bf16.xpose.msra.mxu0 0
    %440 = vmatprep.subr.bf16.mxu0 0
    %441 = vmatpush1.bf16.xpose.msra.mxu0 0
    %442 = vmatprep.mubr.bf16.mxu0 0
    %443 = vmatmul.mubr.bf16.gmra.mrb[0].mxu0 %v405
    %v444 = vpop.f32.mrb[0].mxu0
    %v445 = vadd.f32 0.0, %v444
    %v446 = vpop.f32.mrb[0].mxu0
    %v447 = vpop.f32.mrb[0].mxu0
    %v448 = vpop.f32.mrb[0].mxu0
    %449 = vdwg.mxu0
    %v450 = vsel %vm133, %v395, -inf
    %451 = vmax.xlane.f32.xlu0 %v450
    %v452 = vpop.xlane.xlu0 %451
    %v453 = vsel %vm133, %v445, -inf
    %454 = vmax.xlane.f32.xlu0 %v453
    %v455 = vpop.xlane.xlu0 %454
    %v456 = vsub.f32 %v395, %v452
    %v457 = vsub.f32 %v445, %v455
    %v458 = vmul.f32 %v456, 1.442695
    %v459 = vpow.pop %v458
    %v460 = vmul.f32 %v457, 1.442695
    %v461 = vpow.pop %v460
    %v462 = vsel %vm133, %v459, 0.0
    %463 = vadd.xlane.f32.xlu0 %v462
    %v464 = vpop.xlane.xlu0 %463
    %v465 = vsel %vm133, %v461, 0.0
    %466 = vadd.xlane.f32.xlu0 %v465
    %v467 = vpop.xlane.xlu0 %466
    %v468 = vpack.c.bf16 %v459, %v459
    %v469 = vpack.c.bf16 %v461, %v461
    %470 = vrot.lane.b32.xlu0 %v128, 88
    %v471 = vpop.permute.xlu0 %470
    %v473 = vsel %vm133, %v468, 0
    %v476 = vsel %vm254, %v471, 0
    %478 = vmatprep.subr.bf16.mxu0 0
    %479 = vmatpush1.bf16.msra.mxu0 %v476
    %480 = vmatprep.subr.bf16.mxu0 0
    %481 = vmatpush1.bf16.msra.mxu0 0
    %482 = vmatprep.subr.bf16.mxu0 0
    %483 = vmatpush1.bf16.msra.mxu0 0
    %484 = vmatprep.subr.bf16.mxu0 0
    %485 = vmatpush1.bf16.msra.mxu0 0
    %486 = vmatprep.subr.bf16.mxu0 0
    %487 = vmatpush1.bf16.msra.mxu0 0
    %488 = vmatprep.subr.bf16.mxu0 0
    %489 = vmatpush1.bf16.msra.mxu0 0
    %490 = vmatprep.subr.bf16.mxu0 0
    %491 = vmatpush1.bf16.msra.mxu0 0
    %492 = vmatprep.subr.bf16.mxu0 0
    %493 = vmatpush1.bf16.msra.mxu0 0
    %494 = vmatprep.subr.bf16.mxu0 0
    %495 = vmatpush1.bf16.msra.mxu0 0
    %496 = vmatprep.subr.bf16.mxu0 0
    %497 = vmatpush1.bf16.msra.mxu0 0
    %498 = vmatprep.subr.bf16.mxu0 0
    %499 = vmatpush1.bf16.msra.mxu0 0
    %500 = vmatprep.subr.bf16.mxu0 0
    %501 = vmatpush1.bf16.msra.mxu0 0
    %502 = vmatprep.subr.bf16.mxu0 0
    %503 = vmatpush1.bf16.msra.mxu0 0
    %504 = vmatprep.subr.bf16.mxu0 0
    %505 = vmatpush1.bf16.msra.mxu0 0
    %506 = vmatprep.subr.bf16.mxu0 0
    %507 = vmatpush1.bf16.msra.mxu0 0
    %508 = vmatprep.subr.bf16.mxu0 0
    %509 = vmatpush1.bf16.msra.mxu0 0
    %510 = vmatprep.mubr.bf16.mxu0 0
    %511 = vmatmul.mubr.bf16.gmra.mrb[0].mxu0 %v473
    %v512 = vpop.f32.mrb[0].mxu0
    %v513 = vadd.f32 0.0, %v512
    %v514 = vpop.f32.mrb[0].mxu0
    %v515 = vpop.f32.mrb[0].mxu0
    %v516 = vpop.f32.mrb[0].mxu0
    %517 = vdwg.mxu0
    %518 = vrot.lane.b32.xlu0 %v129, 88
    %v519 = vpop.permute.xlu0 %518
    %v521 = vsel %vm133, %v469, 0
    %v524 = vsel %vm254, %v519, 0
    %526 = vmatprep.subr.bf16.mxu0 0
    %527 = vmatpush1.bf16.msra.mxu0 %v524
    %528 = vmatprep.subr.bf16.mxu0 0
    %529 = vmatpush1.bf16.msra.mxu0 0
    %530 = vmatprep.subr.bf16.mxu0 0
    %531 = vmatpush1.bf16.msra.mxu0 0
    %532 = vmatprep.subr.bf16.mxu0 0
    %533 = vmatpush1.bf16.msra.mxu0 0
    %534 = vmatprep.subr.bf16.mxu0 0
    %535 = vmatpush1.bf16.msra.mxu0 0
    %536 = vmatprep.subr.bf16.mxu0 0
    %537 = vmatpush1.bf16.msra.mxu0 0
    %538 = vmatprep.subr.bf16.mxu0 0
    %539 = vmatpush1.bf16.msra.mxu0 0
    %540 = vmatprep.subr.bf16.mxu0 0
    %541 = vmatpush1.bf16.msra.mxu0 0
    %542 = vmatprep.subr.bf16.mxu0 0
    %543 = vmatpush1.bf16.msra.mxu0 0
    %544 = vmatprep.subr.bf16.mxu0 0
    %545 = vmatpush1.bf16.msra.mxu0 0
    %546 = vmatprep.subr.bf16.mxu0 0
    %547 = vmatpush1.bf16.msra.mxu0 0
    %548 = vmatprep.subr.bf16.mxu0 0
    %549 = vmatpush1.bf16.msra.mxu0 0
    %550 = vmatprep.subr.bf16.mxu0 0
    %551 = vmatpush1.bf16.msra.mxu0 0
    %552 = vmatprep.subr.bf16.mxu0 0
    %553 = vmatpush1.bf16.msra.mxu0 0
    %554 = vmatprep.subr.bf16.mxu0 0
    %555 = vmatpush1.bf16.msra.mxu0 0
    %556 = vmatprep.subr.bf16.mxu0 0
    %557 = vmatpush1.bf16.msra.mxu0 0
    %558 = vmatprep.mubr.bf16.mxu0 0
    %559 = vmatmul.mubr.bf16.gmra.mrb[0].mxu0 %v521
    %v560 = vpop.f32.mrb[0].mxu0
    %v561 = vadd.f32 0.0, %v560
    %v562 = vpop.f32.mrb[0].mxu0
    %v563 = vpop.f32.mrb[0].mxu0
    %v564 = vpop.f32.mrb[0].mxu0
    %565 = vdwg.mxu0
    %v566 = vrcp.pop %v464
    %v567 = vrcp.pop %v467
    %v568 = vmul.f32 %v513, %v566
    %v569 = vmul.f32 %v561, %v567
    %572 = vrot.lane.b32.xlu0 %v568, 8
    %v573 = vpop.permute.xlu0 %572
    %574 = vrot.lane.b32.xlu0 %v569, 8
    %v575 = vpop.permute.xlu0 %574
    %v578 = vsel %vm133, %v348, %v573
    %v579 = vsel %vm133, %v349, %v575
    %v580 = vpack.c.bf16 %v579, %v578
    %v581 = vld [vmem:[#allocation7] sm:$0xf]
    %v582 = vld [vmem:[#allocation7 + $0x4] sm:$0xf]
    %v583 = vld [vmem:[%s3] sm:$0x1]
    %v585 = vlaneseq
    %v586 = vshrl.u32 %v585, 7
    %v587 = vsub.s32 0, %v586
    %v588 = vrot.slane %v583, %v587
    %v592 = vunpack.c.l.b16 %v581
    %v593 = vunpack.c.l.b16 %v582
    %v594 = vpack.c.b16 %v593, %v592
    %vm596 = vcmask 130048
    %v598 = vsel %vm596, %v580, 0
    %600 = vmatprep.subr.bf16.mxu0 0
    %601 = vmatpush1.bf16.msra.mxu0 %v594
    %602 = vmatprep.subr.bf16.mxu0 0
    %603 = vmatpush1.bf16.msra.mxu0 0
    %604 = vmatprep.subr.bf16.mxu0 0
    %605 = vmatpush1.bf16.msra.mxu0 0
    %606 = vmatprep.subr.bf16.mxu0 0
    %607 = vmatpush1.bf16.msra.mxu0 0
    %608 = vmatprep.subr.bf16.mxu0 0
    %609 = vmatpush1.bf16.msra.mxu0 0
    %610 = vmatprep.subr.bf16.mxu0 0
    %611 = vmatpush1.bf16.msra.mxu0 0
    %612 = vmatprep.subr.bf16.mxu0 0
    %613 = vmatpush1.bf16.msra.mxu0 0
    %614 = vmatprep.subr.bf16.mxu0 0
    %615 = vmatpush1.bf16.msra.mxu0 0
    %616 = vmatprep.subr.bf16.mxu0 0
    %617 = vmatpush1.bf16.msra.mxu0 0
    %618 = vmatprep.subr.bf16.mxu0 0
    %619 = vmatpush1.bf16.msra.mxu0 0
    %620 = vmatprep.subr.bf16.mxu0 0
    %621 = vmatpush1.bf16.msra.mxu0 0
    %622 = vmatprep.subr.bf16.mxu0 0
    %623 = vmatpush1.bf16.msra.mxu0 0
    %624 = vmatprep.subr.bf16.mxu0 0
    %625 = vmatpush1.bf16.msra.mxu0 0
    %626 = vmatprep.subr.bf16.mxu0 0
    %627 = vmatpush1.bf16.msra.mxu0 0
    %628 = vmatprep.subr.bf16.mxu0 0
    %629 = vmatpush1.bf16.msra.mxu0 0
    %630 = vmatprep.subr.bf16.mxu0 0
    %631 = vmatpush1.bf16.msra.mxu0 0
    %632 = vmatprep.mubr.bf16.mxu0 0
    %633 = vmatmul.mubr.bf16.gmra.mrb[0].mxu0 %v598
    %v634 = vpop.f32.mrb[0].mxu0
    %v635 = vadd.f32 %v588, %v634
    %v636 = vpop.f32.mrb[0].mxu0
    %v637 = vpop.f32.mrb[0].mxu0
    %v638 = vadd.f32 %v588, %v637
    %v639 = vpop.f32.mrb[0].mxu0
    %640 = vdwg.mxu0
    %641 = vst.msk [vmem:[#allocation8] sm:$0xff] %vm83, %v635
    %642 = vst.msk [vmem:[#allocation8 + $0x8] sm:$0xff] %vm83, %v638
    // Predicated region
    $region30: #{tpu_custom_call.1} parent=1 // pred_check
      _
    $region31: #{tpu_custom_call.1} parent=1 // pred_check_branch
      %644 = sbr.rel (0) target = $region33
    $region32: #{tpu_custom_call.1} parent=1 // pred_region
      %s646 = ssub.s32 256, 256
      %647 = vsyncadd [#allocation4], %s646
      %s648 = sshll.u32 [#allocation8], 4
      %s649 = int_to_ptr.vmem [resolvable:$true] %s648
      %654 = dma.vmem_to_hbm [thread:$0]  %s649, 256, %s4, [#allocation4], 128, 128, 8
    $region33: #{tpu_custom_call.1} parent=1 // pred_fallthru
      _
    // Predicated region
    $region34: #{tpu_custom_call.1} parent=1 // pred_check
      _
    $region35: #{tpu_custom_call.1} parent=1 // pred_check_branch
      %656 = sbr.rel (0) target = $region37
    $region36: #{tpu_custom_call.1} parent=1 // pred_region
      %657 = dma.done [#allocation4], 256
    $region37: #{tpu_custom_call.1} parent=1 // pred_fallthru
      _
    %658 = vsyncpa [#allocation3], 1
    %659 = vsyncpa [#allocation6], 1
    %660 = vsyncpa [#allocation4], 1

</llo_original>
